<compile_context>
chip_gen: v5e
topology: v5e:2x2
jax: 0.10.0
libtpu: 0.0.40
codegen_flags: <defaults>
</compile_context>

<pallas_src>
import functools
import math

import jax
import jax.numpy as jnp
from jax import lax
from jax.experimental import pallas as pl
from jax.experimental.pallas import tpu as pltpu


# ----------------------------------------------------------------------------
# Phase 1: BP fixed-point iterations (single block, early-exit while loop).
# Layout: psi / L / S are [Q, N]  (groups on sublanes, nodes on lanes).
# ----------------------------------------------------------------------------
def _bp_iter_kernel(c_ref, a_ref, psi0_ref,                # inputs
                    psi_ref, s_ref, l_ref, diff_ref, iter_ref,  # outputs
                    *, max_num_iter, bp_max_diff, dumping):
    c = c_ref[0]                        # c = exp(beta) - 1 (SMEM scalar)

    # working copy of the marginals lives in the output ref (VMEM resident)
    psi_ref[...] = psi0_ref[...]        # [Q, N]

    def cond(carry):
        max_diff, num_iter = carry
        return jnp.logical_and(num_iter < max_num_iter, max_diff >= bp_max_diff)

    def body(carry):
        _, num_iter = carry
        psi = psi_ref[...]                                    # [Q, N]
        A = a_ref[...].astype(jnp.float32)                    # [N, N] (bf16 in VMEM)
        L = jnp.log(1.0 + c * psi)                            # [Q, N]
        # A is symmetric:  S[g, i] = sum_j A[i, j] L[g, j] = (L @ A)[g, i]
        S = jnp.dot(L, A, preferred_element_type=jnp.float32)  # [Q, N]
        S = S - jnp.max(S, axis=0, keepdims=True)
        e = jnp.exp(S)
        inv = pl.reciprocal(jnp.sum(e, axis=0, keepdims=True), approx=True)
        new_psi = e * inv
        new_psi = dumping * new_psi + (1.0 - dumping) * psi
        diff = jnp.max(jnp.abs(new_psi - psi))
        psi_ref[...] = new_psi
        return diff, num_iter + 1

    init = (jnp.array(jnp.inf, jnp.float32), jnp.array(0, jnp.int32))
    max_diff, num_iter = lax.while_loop(cond, body, init)

    # final L / S from converged marginals (consumed by the message kernel)
    psi = psi_ref[...]
    A = a_ref[...].astype(jnp.float32)
    L = jnp.log(1.0 + c * psi)
    S = jnp.dot(L, A, preferred_element_type=jnp.float32)
    l_ref[...] = L
    s_ref[...] = S
    diff_ref[0] = max_diff
    iter_ref[0] = num_iter


# ----------------------------------------------------------------------------
# Phase 2: cavity message map, gridded over source-node tiles.
#   msg[g, s, d] = softmax_g( S[s, g] - A[s, d] * L[g, d] )
# Output layout [Q, T_src, N_dst]: N_dst on lanes -> unmasked, lane-dense vst.
# ----------------------------------------------------------------------------
def _bp_msg_kernel(a_ref, s_ref, l_ref, msg_ref):
    Q = l_ref.shape[0]
    A_t = a_ref[...].astype(jnp.float32)            # [T, N]  (bf16 -> f32)

    # pass 1: running max over groups (normalizer), pure VPU
    mx = None
    for g in range(Q):
        m_g = s_ref[:, g:g + 1] - A_t * l_ref[g:g + 1, :]   # [T, N]
        mx = m_g if mx is None else jnp.maximum(mx, m_g)

    # pass 2: exp, accumulate denominator, stash unnormalized in the output ref
    denom = None
    for g in range(Q):
        m_g = s_ref[:, g:g + 1] - A_t * l_ref[g:g + 1, :]
        e_g = jnp.exp(m_g - mx)
        msg_ref[g] = e_g
        denom = e_g if denom is None else denom + e_g

    # pass 3: normalize in place (EUP reciprocal instead of VPU divide)
    inv = pl.reciprocal(denom, approx=True)
    for g in range(Q):
        msg_ref[g] = msg_ref[g] * inv


# ----------------------------------------------------------------------------
# Wrapper
# ----------------------------------------------------------------------------
def bp_forward(adj, psi0, beta, *, max_num_iter=10, bp_max_diff=0.5,
               bp_dumping_rate=1.0):
    """Returns (message_map [N,N,Q], marginal_psi [N,Q], num_iter, max_diff)."""
    N, Q = psi0.shape
    assert adj.shape == (N, N)

    # mirror the paramagnetic-phase check from BP.forward()
    if float(beta) < 0.05:
        raise Exception(
            'beta={0}, indicating a paramagnetic (P) phase in BP'.format(beta))

    # c = exp(beta) - 1, passed as an SMEM scalar
    c = jnp.exp(jnp.asarray(beta, jnp.float32)).reshape((1,)) - 1.0

    # bf16 adjacency (exact for 0/1): halves A's VMEM footprint + DMA bytes
    adj_bf16 = adj.astype(jnp.bfloat16)
    psi0_T = psi0.astype(jnp.float32).T          # [Q, N] lane-dense

    # ---------------- phase 1: BP iterations ----------------
    p1_vmem = 8 * N * N + 64 * Q * N + (2 << 20)     # A (bf16 x2 + f32) + vectors
    phase1 = functools.partial(_bp_iter_kernel,
                               max_num_iter=int(max_num_iter),
                               bp_max_diff=float(bp_max_diff),
                               dumping=float(bp_dumping_rate))
    psi_T, S_T, L_T, max_diff, num_iter = pl.pallas_call(
        phase1,
        out_shape=(
            jax.ShapeDtypeStruct((Q, N), jnp.float32),   # marginal psi (transposed)
            jax.ShapeDtypeStruct((Q, N), jnp.float32),   # S
            jax.ShapeDtypeStruct((Q, N), jnp.float32),   # L
            jax.ShapeDtypeStruct((1,), jnp.float32),     # max_diff
            jax.ShapeDtypeStruct((1,), jnp.int32),       # num_iter
        ),
        in_specs=[
            pl.BlockSpec(memory_space=pltpu.SMEM),       # c
            pl.BlockSpec((N, N), lambda: (0, 0)),        # adjacency (bf16)
            pl.BlockSpec((Q, N), lambda: (0, 0)),        # psi0 [Q, N]
        ],
        out_specs=(
            pl.BlockSpec((Q, N), lambda: (0, 0)),
            pl.BlockSpec((Q, N), lambda: (0, 0)),
            pl.BlockSpec((Q, N), lambda: (0, 0)),
            pl.BlockSpec(memory_space=pltpu.SMEM),
            pl.BlockSpec(memory_space=pltpu.SMEM),
        ),
        compiler_params=pltpu.CompilerParams(
            vmem_limit_bytes=max(p1_vmem, 16 << 20)),
    )(c, adj_bf16, psi0_T)

    # tiny glue transpose in JAX (S per-source-row view for phase 2 tiling)
    S_nq = S_T.T                                     # [N, Q]

    # ---------------- phase 2: cavity message map ----------------
    T = 128 if N % 128 == 0 else N                   # src tile (lane-aligned)
    num_tiles = N // T
    p2_vmem = (2 * (T * N * 2 + T * Q * 4 + Q * N * 4 + Q * T * N * 4)
               + 6 * T * N * 4 + (2 << 20))
    msg_qsd = pl.pallas_call(
        _bp_msg_kernel,
        out_shape=jax.ShapeDtypeStruct((Q, N, N), jnp.float32),
        grid=(num_tiles,),
        in_specs=[
            pl.BlockSpec((T, N), lambda i: (i, 0)),      # A row tile (bf16)
            pl.BlockSpec((T, Q), lambda i: (i, 0)),      # S tile [T, Q]
            pl.BlockSpec((Q, N), lambda i: (0, 0)),      # L full [Q, N]
        ],
        out_specs=pl.BlockSpec((Q, T, N), lambda i: (0, i, 0)),
        compiler_params=pltpu.CompilerParams(
            dimension_semantics=("parallel",),           # megacore over src tiles
            vmem_limit_bytes=max(p2_vmem, 16 << 20)),
    )(adj_bf16, S_nq, L_T)

    # restore the module's [N_src, N_dst, Q] / [N, Q] contracts in the wrapper
    message_map = jnp.transpose(msg_qsd, (1, 2, 0))      # [N, N, Q]
    marginal_psi = psi_T.T                               # [N, Q]
    return message_map, marginal_psi, num_iter[0], max_diff[0]


if __name__ == "__main__":
    key = jax.random.PRNGKey(0)
    k1, k2 = jax.random.split(key)

    N, Q = 256, 4  # 256 nodes (2 src tiles of 128), 4 groups

    # deterministic random undirected graph (symmetric adjacency, zero diag)
    upper = (jax.random.uniform(k1, (N, N)) < 0.1).astype(jnp.float32)
    upper = jnp.triu(upper, k=1)
    adj = upper + upper.T

    # beta init as in BP.__init__ with mean_degree supplied
    mean_degree = float(jnp.sum(adj) / N)
    beta = math.log(Q / (math.sqrt(mean_degree) - 1.0) + 1.0)

    # initial normalized marginals
    psi0 = jax.nn.softmax(jax.random.normal(k2, (N, Q)), axis=-1)

    message_map, marginal_psi, num_iter, max_diff = bp_forward(
        adj, psi0, beta, max_num_iter=10, bp_max_diff=0.5, bp_dumping_rate=1.0)

    jax.block_until_ready((message_map, marginal_psi, num_iter, max_diff))
    print("KERNEL_OK")
</pallas_src>

<mosaic_0001>
module attributes {stable_mosaic.version = 11 : i64} {
  func.func @_bp_iter_kernel(%arg0: memref<1xf32, #tpu.memory_space<smem>>, %arg1: memref<256x256xbf16, #tpu.memory_space<vmem>>, %arg2: memref<4x256xf32, #tpu.memory_space<vmem>>, %arg3: memref<4x256xf32, #tpu.memory_space<vmem>>, %arg4: memref<4x256xf32, #tpu.memory_space<vmem>>, %arg5: memref<4x256xf32, #tpu.memory_space<vmem>>, %arg6: memref<1xf32, #tpu.memory_space<smem>>, %arg7: memref<1xi32, #tpu.memory_space<smem>>) attributes {dimension_semantics = [], scalar_prefetch = 0 : i64, scratch_operands = 0 : i64, tpu.core_type = #tpu.core_type<tc>} {
    %c0 = arith.constant 0 : index
    %0 = memref.load %arg0[%c0] : memref<1xf32, #tpu.memory_space<smem>>
    %c0_0 = arith.constant 0 : index
    %c0_1 = arith.constant 0 : index
    %1 = vector.load %arg2[%c0_0, %c0_1] : memref<4x256xf32, #tpu.memory_space<vmem>>, vector<4x256xf32>
    %c0_2 = arith.constant 0 : index
    %c0_3 = arith.constant 0 : index
    %2 = vector.load %arg3[%c0_2, %c0_3] : memref<4x256xf32, #tpu.memory_space<vmem>>, vector<4x256xf32>
    tpu.vector_store %arg3[%c0_2, %c0_3], %1 {strides = array<i32>} : memref<4x256xf32, #tpu.memory_space<vmem>>, vector<4x256xf32>,
    %cst = arith.constant 0x7F800000 : f32
    %c0_i32 = arith.constant 0 : i32
    %3:2 = scf.while (%arg8 = %cst, %arg9 = %c0_i32) : (f32, i32) -> (f32, i32) {
      %c10_i32 = arith.constant 10 : i32
      %17 = arith.cmpi slt, %arg9, %c10_i32 : i32
      %cst_16 = arith.constant 5.000000e-01 : f32
      %18 = arith.cmpf oge, %arg8, %cst_16 : f32
      %19 = arith.andi %17, %18 : i1
      scf.condition(%19) %arg8, %arg9 : f32, i32
    } do {
    ^bb0(%arg8: f32, %arg9: i32):
      %c0_16 = arith.constant 0 : index
      %c0_17 = arith.constant 0 : index
      %17 = vector.load %arg3[%c0_16, %c0_17] : memref<4x256xf32, #tpu.memory_space<vmem>>, vector<4x256xf32>
      %c0_18 = arith.constant 0 : index
      %c0_19 = arith.constant 0 : index
      %18 = vector.load %arg1[%c0_18, %c0_19] : memref<256x256xbf16, #tpu.memory_space<vmem>>, vector<256x256xbf16>
      %19 = arith.extf %18 : vector<256x256xbf16> to vector<256x256xf32>
      %20 = vector.broadcast %0 : f32 to vector<4x256xf32>
      %21 = arith.mulf %20, %17 : vector<4x256xf32>
      %cst_20 = arith.constant 1.000000e+00 : f32
      %22 = vector.broadcast %cst_20 : f32 to vector<4x256xf32>
      %23 = arith.addf %22, %21 : vector<4x256xf32>
      %24 = math.log %23 : vector<4x256xf32>
      %cst_21 = arith.constant dense<0.000000e+00> : vector<4x256xf32>
      %25 = tpu.matmul %24, %19, %cst_21 {dimension_numbers = #tpu.dot_dimension_numbers<[1], [0], [0], [1], [0, 0, 1, 1], [], []>} : vector<4x256xf32>, vector<256x256xf32>, vector<4x256xf32> -> vector<4x256xf32>
      %cst_22 = arith.constant dense<0xFF800000> : vector<256xf32>
      %26 = vector.multi_reduction <maximumf>, %25, %cst_22 [0] : vector<4x256xf32> to vector<256xf32>
      %27 = vector.shape_cast %26 : vector<256xf32> to vector<1x256xf32>
      %28 = vector.broadcast %27 : vector<1x256xf32> to vector<4x256xf32>
      %29 = arith.subf %25, %28 : vector<4x256xf32>
      %30 = math.exp %29 : vector<4x256xf32>
      %cst_23 = arith.constant dense<0.000000e+00> : vector<256xf32>
      %31 = vector.multi_reduction <add>, %30, %cst_23 [0] : vector<4x256xf32> to vector<256xf32>
      %32 = vector.shape_cast %31 : vector<256xf32> to vector<1x256xf32>
      %33 = tpu.reciprocal %32 {approx = true} : vector<1x256xf32> -> vector<1x256xf32>
      %34 = vector.broadcast %33 : vector<1x256xf32> to vector<4x256xf32>
      %35 = arith.mulf %30, %34 : vector<4x256xf32>
      %cst_24 = arith.constant 1.000000e+00 : f32
      %36 = vector.broadcast %cst_24 : f32 to vector<4x256xf32>
      %37 = arith.mulf %36, %35 : vector<4x256xf32>
      %cst_25 = arith.constant 0.000000e+00 : f32
      %38 = vector.broadcast %cst_25 : f32 to vector<4x256xf32>
      %39 = arith.mulf %38, %17 : vector<4x256xf32>
      %40 = arith.addf %37, %39 : vector<4x256xf32>
      %41 = arith.subf %40, %17 : vector<4x256xf32>
      %42 = math.absf %41 : vector<4x256xf32>
      %43 = vector.shape_cast %42 : vector<4x256xf32> to vector<1x4x256xf32>
      %cst_26 = arith.constant dense<0xFF800000> : vector<1xf32>
      %44 = vector.multi_reduction <maximumf>, %43, %cst_26 [1, 2] : vector<1x4x256xf32> to vector<1xf32>
      %45 = vector.shape_cast %44 : vector<1xf32> to vector<1x1x1xf32>
      %46 = vector.extract %45[0, 0, 0] : f32 from vector<1x1x1xf32>
      %c0_27 = arith.constant 0 : index
      %c0_28 = arith.constant 0 : index
      %47 = vector.load %arg3[%c0_27, %c0_28] : memref<4x256xf32, #tpu.memory_space<vmem>>, vector<4x256xf32>
      tpu.vector_store %arg3[%c0_27, %c0_28], %40 {strides = array<i32>} : memref<4x256xf32, #tpu.memory_space<vmem>>, vector<4x256xf32>,
      %c1_i32 = arith.constant 1 : i32
      %48 = arith.addi %arg9, %c1_i32 : i32
      scf.yield %46, %48 : f32, i32
    }
    %c0_4 = arith.constant 0 : index
    %c0_5 = arith.constant 0 : index
    %4 = vector.load %arg3[%c0_4, %c0_5] : memref<4x256xf32, #tpu.memory_space<vmem>>, vector<4x256xf32>
    %c0_6 = arith.constant 0 : index
    %c0_7 = arith.constant 0 : index
    %5 = vector.load %arg1[%c0_6, %c0_7] : memref<256x256xbf16, #tpu.memory_space<vmem>>, vector<256x256xbf16>
    %6 = arith.extf %5 : vector<256x256xbf16> to vector<256x256xf32>
    %7 = vector.broadcast %0 : f32 to vector<4x256xf32>
    %8 = arith.mulf %7, %4 : vector<4x256xf32>
    %cst_8 = arith.constant 1.000000e+00 : f32
    %9 = vector.broadcast %cst_8 : f32 to vector<4x256xf32>
    %10 = arith.addf %9, %8 : vector<4x256xf32>
    %11 = math.log %10 : vector<4x256xf32>
    %cst_9 = arith.constant dense<0.000000e+00> : vector<4x256xf32>
    %12 = tpu.matmul %11, %6, %cst_9 {dimension_numbers = #tpu.dot_dimension_numbers<[1], [0], [0], [1], [0, 0, 1, 1], [], []>} : vector<4x256xf32>, vector<256x256xf32>, vector<4x256xf32> -> vector<4x256xf32>
    %c0_10 = arith.constant 0 : index
    %c0_11 = arith.constant 0 : index
    %13 = vector.load %arg5[%c0_10, %c0_11] : memref<4x256xf32, #tpu.memory_space<vmem>>, vector<4x256xf32>
    tpu.vector_store %arg5[%c0_10, %c0_11], %11 {strides = array<i32>} : memref<4x256xf32, #tpu.memory_space<vmem>>, vector<4x256xf32>,
    %c0_12 = arith.constant 0 : index
    %c0_13 = arith.constant 0 : index
    %14 = vector.load %arg4[%c0_12, %c0_13] : memref<4x256xf32, #tpu.memory_space<vmem>>, vector<4x256xf32>
    tpu.vector_store %arg4[%c0_12, %c0_13], %12 {strides = array<i32>} : memref<4x256xf32, #tpu.memory_space<vmem>>, vector<4x256xf32>,
    %c0_14 = arith.constant 0 : index
    %15 = memref.load %arg6[%c0_14] : memref<1xf32, #tpu.memory_space<smem>>
    memref.store %3#0, %arg6[%c0_14] : memref<1xf32, #tpu.memory_space<smem>>
    %c0_15 = arith.constant 0 : index
    %16 = memref.load %arg7[%c0_15] : memref<1xi32, #tpu.memory_space<smem>>
    memref.store %3#1, %arg7[%c0_15] : memref<1xi32, #tpu.memory_space<smem>>
    return
  }
}

</mosaic_0001>

<llo_original>
// kernel: tpu_custom_call.1
$region0: #{tpu_custom_call.1}
  #allocation0 [shape = 'u32[]', space=smem, size = 0x4, offset = 0x4, fixed_abs, tag = 'smem constant byte address 0x4 - core index']
  #allocation1 [shape = 'u32[72,128]{1,0:T(1,128)}', space=vmem, size = 0x9000, scoped, tag = 'internal scratch']
  #allocation2 [shape = 'f32[1]{0:T(128)S(6)}', space=smem, size = 0x200, scoped, tag = 'scoped memory for tpu_custom_call.1']
  %s0 = inlined_call_operand.<no memory space> [shape: f32[1], index: 0, kind: input, shape index: {}]
  %s1 = inlined_call_operand.hbm [shape: bf16[256,256], index: 1, kind: input, shape index: {}]
  %s2 = inlined_call_operand.hbm [shape: f32[4,256], index: 2, kind: input, shape index: {}]
  %s3 = inlined_call_operand.hbm [shape: f32[4,256], index: 3, kind: output, shape index: {0}]
  %s4 = inlined_call_operand.hbm [shape: f32[4,256], index: 4, kind: output, shape index: {1}]
  %s5 = inlined_call_operand.hbm [shape: f32[4,256], index: 5, kind: output, shape index: {2}]
  %s6 = inlined_call_operand.hbm [shape: f32[1], index: 6, kind: output, shape index: {3}]
  %s7 = inlined_call_operand.hbm [shape: s32[1], index: 7, kind: output, shape index: {4}]
  %8 = xla_tuple %s3, %s4, %s5, %s6, %s7
  %s9 = sld [smem:[#allocation0]]
  $region69: #{tpu_custom_call.1} parent=0
    _
  %s11 = ssub.s32 1, %s9
  %s12 = scalar_select 0, %s11, %s9
  %13 = sst [smem:[#allocation2]] %s0
  $region1: #{tpu_custom_call.1} parent=0
    #allocation3 [shape = 'u8[131072]{0}', space=vmem, size = 0x20000, scoped, tag = 'input window, operand 1, single buffered']
    #allocation4 [shape = 's32[1]{0}', space=sflag, size = 0x4, scoped, tag = 'scoped memory for tpu_custom_call.1']
    #allocation5 [shape = 's32[1]{0}', space=sflag, size = 0x4, scoped, tag = 'scoped memory for tpu_custom_call.1']
    #allocation6 [shape = 's32[1]{0}', space=sflag, size = 0x4, scoped, tag = 'scoped memory for tpu_custom_call.1']
    #allocation7 [shape = 'u8[4096]{0}', space=vmem, size = 0x1000, scoped, tag = 'input window, operand 2, single buffered']
    #allocation8 [shape = 's32[1]{0}', space=sflag, size = 0x4, scoped, tag = 'scoped memory for tpu_custom_call.1']
    #allocation9 [shape = 'u8[4096]{0}', space=vmem, size = 0x1000, scoped, tag = 'output window, operand 0, single buffered']
    #allocation10 [shape = 'u8[4096]{0}', space=vmem, size = 0x1000, scoped, tag = 'output window, operand 1, single buffered']
    #allocation11 [shape = 's32[1]{0}', space=sflag, size = 0x4, scoped, tag = 'scoped memory for tpu_custom_call.1']
    #allocation12 [shape = 'u8[4096]{0}', space=vmem, size = 0x1000, scoped, tag = 'output window, operand 2, single buffered']
    #allocation13 [shape = 'u8[512]{0}', space=smem, size = 0x200, scoped, tag = 'output window, operand 3, single buffered']
    #allocation14 [shape = 'u8[512]{0}', space=smem, size = 0x200, scoped, tag = 'output window, operand 4, single buffered']
    #allocation15 [shape = 's32[1]{0}', space=sflag, size = 0x4, scoped, tag = 'scoped memory for tpu_custom_call.1']
    %14 = vsyncpa [#allocation4], 0
    %15 = vsyncpa [#allocation8], 0
    %16 = vsyncpa [#allocation5], 0
    %17 = vsyncpa [#allocation11], 0
    %18 = vsyncpa [#allocation6], 0
    %19 = vsyncpa [#allocation15], 0
    // Predicated region
    $region2: #{tpu_custom_call.1} parent=1 // pred_check
      _
    $region3: #{tpu_custom_call.1} parent=1 // pred_check_branch
      %21 = sbr.rel (0) target = $region5
    $region4: #{tpu_custom_call.1} parent=1 // pred_region
      _
    $region5: #{tpu_custom_call.1} parent=1 // pred_fallthru
      _
    // Predicated region
    $region6: #{tpu_custom_call.1} parent=1 // pred_check
      _
    $region7: #{tpu_custom_call.1} parent=1 // pred_check_branch
      %23 = sbr.rel (0) target = $region9
    $region8: #{tpu_custom_call.1} parent=1 // pred_region
      %25 = vsyncadd [#allocation4], 0
      %s26 = sshll.u32 %s1, 4
      %s27 = int_to_ptr.hbm [resolvable:$true] %s26
      %s28 = sshll.u32 [#allocation3], 4
      %s29 = int_to_ptr.vmem [resolvable:$true] %s28
      %34 = dma.hbm_to_vmem [thread:$0]  %s27, 4096, %s29, [#allocation4], 128, 128, 8
    $region9: #{tpu_custom_call.1} parent=1 // pred_fallthru
      _
    // Predicated region
    $region10: #{tpu_custom_call.1} parent=1 // pred_check
      _
    $region11: #{tpu_custom_call.1} parent=1 // pred_check_branch
      %36 = sbr.rel (0) target = $region13
    $region12: #{tpu_custom_call.1} parent=1 // pred_region
      %38 = vsyncadd [#allocation8], 0
      %s40 = sshll.u32 %s2, 4
      %s41 = int_to_ptr.hbm [resolvable:$true] %s40
      %s42 = sshll.u32 [#allocation7], 4
      %s43 = int_to_ptr.vmem [resolvable:$true] %s42
      %45 = dma.hbm_to_vmem [thread:$0]  %s41, 128, %s43, [#allocation8]
    $region13: #{tpu_custom_call.1} parent=1 // pred_fallthru
      _
    // Predicated region
    $region14: #{tpu_custom_call.1} parent=1 // pred_check
      _
    $region15: #{tpu_custom_call.1} parent=1 // pred_check_branch
      %47 = sbr.rel (0) target = $region17
    $region16: #{tpu_custom_call.1} parent=1 // pred_region
      %49 = dma.done [#allocation4], 4096
    $region17: #{tpu_custom_call.1} parent=1 // pred_fallthru
      _
    // Predicated region
    $region18: #{tpu_custom_call.1} parent=1 // pred_check
      _
    $region19: #{tpu_custom_call.1} parent=1 // pred_check_branch
      %51 = sbr.rel (0) target = $region21
    $region20: #{tpu_custom_call.1} parent=1 // pred_region
      %53 = dma.done [#allocation8], 128
    $region21: #{tpu_custom_call.1} parent=1 // pred_fallthru
      _
    %s54 = sld [smem:[#allocation2]]
    %v55 = vld [vmem:[#allocation7] sm:$0xff]
    %56 = vst [vmem:[#allocation9] sm:$0xff] %v55
    // While loop
    $region22: #{tpu_custom_call.1} parent=1 // loop_pre_header
      _
    $region23: #{tpu_custom_call.1} parent=1 // loop_header
      %s58 = sphi inf, %s323
      %s59 = sphi 0, %s330
      %p60 = scmp.lt.s32.totalorder %s59, 10
      %p61 = scmp.ge.f32.partialorder %s58, 0.5
      %p62 = pnand %p60, %p61
      %p63 = pneg %p62
    $region24: #{tpu_custom_call.1} parent=1 // loop_header_branch
      %65 = sbr.rel (%p62) target = $region28
    $region25: #{tpu_custom_call.1} parent=1 // loop_body
      %v66 = vld [vmem:[#allocation9] sm:$0xff]
      %v67 = vld [vmem:[#allocation3] sm:$0xff]
      %v68 = vld [vmem:[#allocation3 + $0x8] sm:$0xff]
      %v69 = vld [vmem:[#allocation3 + $0x10] sm:$0xff]
      %v70 = vld [vmem:[#allocation3 + $0x18] sm:$0xff]
      %v71 = vld [vmem:[#allocation3 + $0x20] sm:$0xff]
      %v72 = vld [vmem:[#allocation3 + $0x28] sm:$0xff]
      %v73 = vld [vmem:[#allocation3 + $0x30] sm:$0xff]
      %v74 = vld [vmem:[#allocation3 + $0x38] sm:$0xff]
      %v75 = vld [vmem:[#allocation3 + $0x40] sm:$0xff]
      %v76 = vld [vmem:[#allocation3 + $0x48] sm:$0xff]
      %v77 = vld [vmem:[#allocation3 + $0x50] sm:$0xff]
      %v78 = vld [vmem:[#allocation3 + $0x58] sm:$0xff]
      %v79 = vld [vmem:[#allocation3 + $0x60] sm:$0xff]
      %v80 = vld [vmem:[#allocation3 + $0x68] sm:$0xff]
      %v81 = vld [vmem:[#allocation3 + $0x70] sm:$0xff]
      %v82 = vld [vmem:[#allocation3 + $0x78] sm:$0xff]
      %v83 = vld [vmem:[#allocation3 + $0x80] sm:$0xff]
      %v84 = vld [vmem:[#allocation3 + $0x88] sm:$0xff]
      %v85 = vld [vmem:[#allocation3 + $0x90] sm:$0xff]
      %v86 = vld [vmem:[#allocation3 + $0x98] sm:$0xff]
      %v87 = vld [vmem:[#allocation3 + $0xa0] sm:$0xff]
      %v88 = vld [vmem:[#allocation3 + $0xa8] sm:$0xff]
      %v89 = vld [vmem:[#allocation3 + $0xb0] sm:$0xff]
      %v90 = vld [vmem:[#allocation3 + $0xb8] sm:$0xff]
      %v91 = vld [vmem:[#allocation3 + $0xc0] sm:$0xff]
      %v92 = vld [vmem:[#allocation3 + $0xc8] sm:$0xff]
      %v93 = vld [vmem:[#allocation3 + $0xd0] sm:$0xff]
      %v94 = vld [vmem:[#allocation3 + $0xd8] sm:$0xff]
      %v95 = vld [vmem:[#allocation3 + $0xe0] sm:$0xff]
      %v96 = vld [vmem:[#allocation3 + $0xe8] sm:$0xff]
      %v97 = vld [vmem:[#allocation3 + $0xf0] sm:$0xff]
      %v98 = vld [vmem:[#allocation3 + $0xf8] sm:$0xff]
      %v99 = vunpack.c.l.bf16 %v67
      %v100 = vunpack.c.h.bf16 %v67
      %v101 = vunpack.c.l.bf16 %v68
      %v102 = vunpack.c.h.bf16 %v68
      %v103 = vunpack.c.l.bf16 %v69
      %v104 = vunpack.c.h.bf16 %v69
      %v105 = vunpack.c.l.bf16 %v70
      %v106 = vunpack.c.h.bf16 %v70
      %v107 = vunpack.c.l.bf16 %v71
      %v108 = vunpack.c.h.bf16 %v71
      %v109 = vunpack.c.l.bf16 %v72
      %v110 = vunpack.c.h.bf16 %v72
      %v111 = vunpack.c.l.bf16 %v73
      %v112 = vunpack.c.h.bf16 %v73
      %v113 = vunpack.c.l.bf16 %v74
      %v114 = vunpack.c.h.bf16 %v74
      %v115 = vunpack.c.l.bf16 %v75
      %v116 = vunpack.c.h.bf16 %v75
      %v117 = vunpack.c.l.bf16 %v76
      %v118 = vunpack.c.h.bf16 %v76
      %v119 = vunpack.c.l.bf16 %v77
      %v120 = vunpack.c.h.bf16 %v77
      %v121 = vunpack.c.l.bf16 %v78
      %v122 = vunpack.c.h.bf16 %v78
      %v123 = vunpack.c.l.bf16 %v79
      %v124 = vunpack.c.h.bf16 %v79
      %v125 = vunpack.c.l.bf16 %v80
      %v126 = vunpack.c.h.bf16 %v80
      %v127 = vunpack.c.l.bf16 %v81
      %v128 = vunpack.c.h.bf16 %v81
      %v129 = vunpack.c.l.bf16 %v82
      %v130 = vunpack.c.h.bf16 %v82
      %v131 = vunpack.c.l.bf16 %v83
      %v132 = vunpack.c.h.bf16 %v83
      %v133 = vunpack.c.l.bf16 %v84
      %v134 = vunpack.c.h.bf16 %v84
      %v135 = vunpack.c.l.bf16 %v85
      %v136 = vunpack.c.h.bf16 %v85
      %v137 = vunpack.c.l.bf16 %v86
      %v138 = vunpack.c.h.bf16 %v86
      %v139 = vunpack.c.l.bf16 %v87
      %v140 = vunpack.c.h.bf16 %v87
      %v141 = vunpack.c.l.bf16 %v88
      %v142 = vunpack.c.h.bf16 %v88
      %v143 = vunpack.c.l.bf16 %v89
      %v144 = vunpack.c.h.bf16 %v89
      %v145 = vunpack.c.l.bf16 %v90
      %v146 = vunpack.c.h.bf16 %v90
      %v147 = vunpack.c.l.bf16 %v91
      %v148 = vunpack.c.h.bf16 %v91
      %v149 = vunpack.c.l.bf16 %v92
      %v150 = vunpack.c.h.bf16 %v92
      %v151 = vunpack.c.l.bf16 %v93
      %v152 = vunpack.c.h.bf16 %v93
      %v153 = vunpack.c.l.bf16 %v94
      %v154 = vunpack.c.h.bf16 %v94
      %v155 = vunpack.c.l.bf16 %v95
      %v156 = vunpack.c.h.bf16 %v95
      %v157 = vunpack.c.l.bf16 %v96
      %v158 = vunpack.c.h.bf16 %v96
      %v159 = vunpack.c.l.bf16 %v97
      %v160 = vunpack.c.h.bf16 %v97
      %v161 = vunpack.c.l.bf16 %v98
      %v162 = vunpack.c.h.bf16 %v98
      %v163 = vstv %s54
      %v164 = vmul.f32 %v163, %v66
      %v165 = vadd.f32 %v164, 1.0
      %v166 = vlog2.pop %v165
      %v167 = vmul.f32 %v166, 0.6931472
      %169 = vst [vmem:[#allocation1] ss:$2 sm:$0xff] %v167
      %v170 = vld.sshfl [vmem:[#allocation1] sm:$0xff pattern:$0x75316420]
      %v171 = vld.sshfl [vmem:[#allocation1 + $0x8] sm:$0xff pattern:$0x75316420]
      %174 = vmatpush.msra.mxu0 %v129
      %175 = vmatpush.msra.mxu0 %v127
      %176 = vmatpush.msra.mxu0 %v125
      %177 = vmatpush.msra.mxu0 %v123
      %178 = vmatpush.msra.mxu0 %v121
      %179 = vmatpush.msra.mxu0 %v119
      %180 = vmatpush.msra.mxu0 %v117
      %181 = vmatpush.msra.mxu0 %v115
      %182 = vmatpush.msra.mxu0 %v113
      %183 = vmatpush.msra.mxu0 %v111
      %184 = vmatpush.msra.mxu0 %v109
      %185 = vmatpush.msra.mxu0 %v107
      %186 = vmatpush.msra.mxu0 %v105
      %187 = vmatpush.msra.mxu0 %v103
      %188 = vmatpush.msra.mxu0 %v101
      %189 = vmatpush.msra.mxu0 %v99
      %190 = vmatmul.f32.gmra.mxu0 %v170
      %v191 = vpop.f32.mrf.mxu0
      %v192 = vadd.f32 0.0, %v191
      %193 = vdwg.mxu0
      %194 = vmatpush.msra.mxu0 %v161
      %195 = vmatpush.msra.mxu0 %v159
      %196 = vmatpush.msra.mxu0 %v157
      %197 = vmatpush.msra.mxu0 %v155
      %198 = vmatpush.msra.mxu0 %v153
      %199 = vmatpush.msra.mxu0 %v151
      %200 = vmatpush.msra.mxu0 %v149
      %201 = vmatpush.msra.mxu0 %v147
      %202 = vmatpush.msra.mxu0 %v145
      %203 = vmatpush.msra.mxu0 %v143
      %204 = vmatpush.msra.mxu0 %v141
      %205 = vmatpush.msra.mxu0 %v139
      %206 = vmatpush.msra.mxu0 %v137
      %207 = vmatpush.msra.mxu0 %v135
      %208 = vmatpush.msra.mxu0 %v133
      %209 = vmatpush.msra.mxu0 %v131
      %210 = vmatmul.f32.gmra.mxu0 %v171
      %v211 = vpop.f32.mrf.mxu0
      %v212 = vadd.f32 %v192, %v211
      %213 = vdwg.mxu0
      %214 = vmatpush.msra.mxu0 %v130
      %215 = vmatpush.msra.mxu0 %v128
      %216 = vmatpush.msra.mxu0 %v126
      %217 = vmatpush.msra.mxu0 %v124
      %218 = vmatpush.msra.mxu0 %v122
      %219 = vmatpush.msra.mxu0 %v120
      %220 = vmatpush.msra.mxu0 %v118
      %221 = vmatpush.msra.mxu0 %v116
      %222 = vmatpush.msra.mxu0 %v114
      %223 = vmatpush.msra.mxu0 %v112
      %224 = vmatpush.msra.mxu0 %v110
      %225 = vmatpush.msra.mxu0 %v108
      %226 = vmatpush.msra.mxu0 %v106
      %227 = vmatpush.msra.mxu0 %v104
      %228 = vmatpush.msra.mxu0 %v102
      %229 = vmatpush.msra.mxu0 %v100
      %230 = vmatmul.f32.gmra.mxu0 %v170
      %v231 = vpop.f32.mrf.mxu0
      %v232 = vadd.f32 0.0, %v231
      %233 = vdwg.mxu0
      %234 = vmatpush.msra.mxu0 %v162
      %235 = vmatpush.msra.mxu0 %v160
      %236 = vmatpush.msra.mxu0 %v158
      %237 = vmatpush.msra.mxu0 %v156
      %238 = vmatpush.msra.mxu0 %v154
      %239 = vmatpush.msra.mxu0 %v152
      %240 = vmatpush.msra.mxu0 %v150
      %241 = vmatpush.msra.mxu0 %v148
      %242 = vmatpush.msra.mxu0 %v146
      %243 = vmatpush.msra.mxu0 %v144
      %244 = vmatpush.msra.mxu0 %v142
      %245 = vmatpush.msra.mxu0 %v140
      %246 = vmatpush.msra.mxu0 %v138
      %247 = vmatpush.msra.mxu0 %v136
      %248 = vmatpush.msra.mxu0 %v134
      %249 = vmatpush.msra.mxu0 %v132
      %250 = vmatmul.f32.gmra.mxu0 %v171
      %v251 = vpop.f32.mrf.mxu0
      %v252 = vadd.f32 %v232, %v251
      %253 = vdwg.mxu0
      %vm254 = vcmask 1043456
      %v255 = vsel %vm254, %v212, -inf
      %v256 = vrot.slane %v255, 4
      %v257 = vmax.f32 %v255, %v256
      %v258 = vrot.slane %v257, 2
      %v259 = vmax.f32 %v257, %v258
      %v260 = vrot.slane %v259, 1
      %v261 = vmax.f32 %v259, %v260
      %v262 = vsel %vm254, %v252, -inf
      %v263 = vrot.slane %v262, 4
      %v264 = vmax.f32 %v262, %v263
      %v265 = vrot.slane %v264, 2
      %v266 = vmax.f32 %v264, %v265
      %v267 = vrot.slane %v266, 1
      %v268 = vmax.f32 %v266, %v267
      %v269 = vsub.f32 %v212, %v261
      %v270 = vsub.f32 %v252, %v268
      %v271 = vmul.f32 %v269, 1.442695
      %v272 = vpow.pop %v271
      %v273 = vmul.f32 %v270, 1.442695
      %v274 = vpow.pop %v273
      %v275 = vsel %vm254, %v272, 0.0
      %v276 = vrot.slane %v275, 4
      %v277 = vadd.f32 %v275, %v276
      %v278 = vrot.slane %v277, 2
      %v279 = vadd.f32 %v277, %v278
      %v280 = vrot.slane %v279, 1
      %v281 = vadd.f32 %v279, %v280
      %v282 = vsel %vm254, %v274, 0.0
      %v283 = vrot.slane %v282, 4
      %v284 = vadd.f32 %v282, %v283
      %v285 = vrot.slane %v284, 2
      %v286 = vadd.f32 %v284, %v285
      %v287 = vrot.slane %v286, 1
      %v288 = vadd.f32 %v286, %v287
      %v289 = vrcp.pop %v281
      %v290 = vrcp.pop %v288
      %v291 = vmul.f32 %v272, %v289
      %v292 = vmul.f32 %v274, %v290
      %v293 = vmul.f32 %v66, 0.0
      %295 = vst [vmem:[#allocation1] ss:$2 sm:$0xff] %v293
      %v296 = vld.sshfl [vmem:[#allocation1] sm:$0xff pattern:$0x75316420]
      %v297 = vld.sshfl [vmem:[#allocation1 + $0x8] sm:$0xff pattern:$0x75316420]
      %v300 = vadd.f32 %v291, %v296
      %v301 = vadd.f32 %v292, %v297
      %303 = vst [vmem:[#allocation1] ss:$2 sm:$0xff] %v66
      %v304 = vld.sshfl [vmem:[#allocation1] sm:$0xff pattern:$0x75316420]
      %v305 = vld.sshfl [vmem:[#allocation1 + $0x8] sm:$0xff pattern:$0x75316420]
      %v308 = vsub.f32 %v300, %v304
      %v309 = vsub.f32 %v301, %v305
      %v310 = vand.u32 2147483647, %v308
      %v311 = vand.u32 2147483647, %v309
      %v312 = vsel %vm254, %v310, -inf
      %v313 = vsel %vm254, %v311, -inf
      %v314 = vmax.f32 %v312, %v313
      %315 = vmax.xlane.f32.xlu0 %v314
      %v316 = vpop.xlane.xlu0 %315
      %v317 = vrot.slane %v316, 4
      %v318 = vmax.f32 %v316, %v317
      %v319 = vrot.slane %v318, 2
      %v320 = vmax.f32 %v318, %v319
      %v321 = vrot.slane %v320, 1
      %v322 = vmax.f32 %v320, %v321
      %s323 = vtos %v322
      %v326 = vrot.slane %v301, 4
      %v327 = vsel %vm254, %v300, %v326
      %329 = vst [vmem:[#allocation9] sm:$0xff] %v327
      %s330 = sadd.s32 %s59, 1
    $region26: #{tpu_custom_call.1} parent=1 // loop_footer
      _
    $region27: #{tpu_custom_call.1} parent=1 // loop_footer_branch
      %57 = sbr.rel target = $region23
    $region28: #{tpu_custom_call.1} parent=1 // loop_exit
      _
    %v331 = vld [vmem:[#allocation9] sm:$0xff]
    %v332 = vld [vmem:[#allocation3] sm:$0xff]
    %v333 = vld [vmem:[#allocation3 + $0x8] sm:$0xff]
    %v334 = vld [vmem:[#allocation3 + $0x10] sm:$0xff]
    %v335 = vld [vmem:[#allocation3 + $0x18] sm:$0xff]
    %v336 = vld [vmem:[#allocation3 + $0x20] sm:$0xff]
    %v337 = vld [vmem:[#allocation3 + $0x28] sm:$0xff]
    %v338 = vld [vmem:[#allocation3 + $0x30] sm:$0xff]
    %v339 = vld [vmem:[#allocation3 + $0x38] sm:$0xff]
    %v340 = vld [vmem:[#allocation3 + $0x40] sm:$0xff]
    %v341 = vld [vmem:[#allocation3 + $0x48] sm:$0xff]
    %v342 = vld [vmem:[#allocation3 + $0x50] sm:$0xff]
    %v343 = vld [vmem:[#allocation3 + $0x58] sm:$0xff]
    %v344 = vld [vmem:[#allocation3 + $0x60] sm:$0xff]
    %v345 = vld [vmem:[#allocation3 + $0x68] sm:$0xff]
    %v346 = vld [vmem:[#allocation3 + $0x70] sm:$0xff]
    %v347 = vld [vmem:[#allocation3 + $0x78] sm:$0xff]
    %v348 = vld [vmem:[#allocation3 + $0x80] sm:$0xff]
    %v349 = vld [vmem:[#allocation3 + $0x88] sm:$0xff]
    %v350 = vld [vmem:[#allocation3 + $0x90] sm:$0xff]
    %v351 = vld [vmem:[#allocation3 + $0x98] sm:$0xff]
    %v352 = vld [vmem:[#allocation3 + $0xa0] sm:$0xff]
    %v353 = vld [vmem:[#allocation3 + $0xa8] sm:$0xff]
    %v354 = vld [vmem:[#allocation3 + $0xb0] sm:$0xff]
    %v355 = vld [vmem:[#allocation3 + $0xb8] sm:$0xff]
    %v356 = vld [vmem:[#allocation3 + $0xc0] sm:$0xff]
    %v357 = vld [vmem:[#allocation3 + $0xc8] sm:$0xff]
    %v358 = vld [vmem:[#allocation3 + $0xd0] sm:$0xff]
    %v359 = vld [vmem:[#allocation3 + $0xd8] sm:$0xff]
    %v360 = vld [vmem:[#allocation3 + $0xe0] sm:$0xff]
    %v361 = vld [vmem:[#allocation3 + $0xe8] sm:$0xff]
    %v362 = vld [vmem:[#allocation3 + $0xf0] sm:$0xff]
    %v363 = vld [vmem:[#allocation3 + $0xf8] sm:$0xff]
    %v364 = vunpack.c.l.bf16 %v332
    %v365 = vunpack.c.h.bf16 %v332
    %v366 = vunpack.c.l.bf16 %v333
    %v367 = vunpack.c.h.bf16 %v333
    %v368 = vunpack.c.l.bf16 %v334
    %v369 = vunpack.c.h.bf16 %v334
    %v370 = vunpack.c.l.bf16 %v335
    %v371 = vunpack.c.h.bf16 %v335
    %v372 = vunpack.c.l.bf16 %v336
    %v373 = vunpack.c.h.bf16 %v336
    %v374 = vunpack.c.l.bf16 %v337
    %v375 = vunpack.c.h.bf16 %v337
    %v376 = vunpack.c.l.bf16 %v338
    %v377 = vunpack.c.h.bf16 %v338
    %v378 = vunpack.c.l.bf16 %v339
    %v379 = vunpack.c.h.bf16 %v339
    %v380 = vunpack.c.l.bf16 %v340
    %v381 = vunpack.c.h.bf16 %v340
    %v382 = vunpack.c.l.bf16 %v341
    %v383 = vunpack.c.h.bf16 %v341
    %v384 = vunpack.c.l.bf16 %v342
    %v385 = vunpack.c.h.bf16 %v342
    %v386 = vunpack.c.l.bf16 %v343
    %v387 = vunpack.c.h.bf16 %v343
    %v388 = vunpack.c.l.bf16 %v344
    %v389 = vunpack.c.h.bf16 %v344
    %v390 = vunpack.c.l.bf16 %v345
    %v391 = vunpack.c.h.bf16 %v345
    %v392 = vunpack.c.l.bf16 %v346
    %v393 = vunpack.c.h.bf16 %v346
    %v394 = vunpack.c.l.bf16 %v347
    %v395 = vunpack.c.h.bf16 %v347
    %v396 = vunpack.c.l.bf16 %v348
    %v397 = vunpack.c.h.bf16 %v348
    %v398 = vunpack.c.l.bf16 %v349
    %v399 = vunpack.c.h.bf16 %v349
    %v400 = vunpack.c.l.bf16 %v350
    %v401 = vunpack.c.h.bf16 %v350
    %v402 = vunpack.c.l.bf16 %v351
    %v403 = vunpack.c.h.bf16 %v351
    %v404 = vunpack.c.l.bf16 %v352
    %v405 = vunpack.c.h.bf16 %v352
    %v406 = vunpack.c.l.bf16 %v353
    %v407 = vunpack.c.h.bf16 %v353
    %v408 = vunpack.c.l.bf16 %v354
    %v409 = vunpack.c.h.bf16 %v354
    %v410 = vunpack.c.l.bf16 %v355
    %v411 = vunpack.c.h.bf16 %v355
    %v412 = vunpack.c.l.bf16 %v356
    %v413 = vunpack.c.h.bf16 %v356
    %v414 = vunpack.c.l.bf16 %v357
    %v415 = vunpack.c.h.bf16 %v357
    %v416 = vunpack.c.l.bf16 %v358
    %v417 = vunpack.c.h.bf16 %v358
    %v418 = vunpack.c.l.bf16 %v359
    %v419 = vunpack.c.h.bf16 %v359
    %v420 = vunpack.c.l.bf16 %v360
    %v421 = vunpack.c.h.bf16 %v360
    %v422 = vunpack.c.l.bf16 %v361
    %v423 = vunpack.c.h.bf16 %v361
    %v424 = vunpack.c.l.bf16 %v362
    %v425 = vunpack.c.h.bf16 %v362
    %v426 = vunpack.c.l.bf16 %v363
    %v427 = vunpack.c.h.bf16 %v363
    %v428 = vstv %s54
    %v429 = vmul.f32 %v428, %v331
    %v430 = vadd.f32 %v429, 1.0
    %v431 = vlog2.pop %v430
    %v432 = vmul.f32 %v431, 0.6931472
    %434 = vst [vmem:[#allocation1] ss:$2 sm:$0xff] %v432
    %v435 = vld.sshfl [vmem:[#allocation1] sm:$0xff pattern:$0x75316420]
    %v436 = vld.sshfl [vmem:[#allocation1 + $0x8] sm:$0xff pattern:$0x75316420]
    %439 = vmatpush.msra.mxu0 %v394
    %440 = vmatpush.msra.mxu0 %v392
    %441 = vmatpush.msra.mxu0 %v390
    %442 = vmatpush.msra.mxu0 %v388
    %443 = vmatpush.msra.mxu0 %v386
    %444 = vmatpush.msra.mxu0 %v384
    %445 = vmatpush.msra.mxu0 %v382
    %446 = vmatpush.msra.mxu0 %v380
    %447 = vmatpush.msra.mxu0 %v378
    %448 = vmatpush.msra.mxu0 %v376
    %449 = vmatpush.msra.mxu0 %v374
    %450 = vmatpush.msra.mxu0 %v372
    %451 = vmatpush.msra.mxu0 %v370
    %452 = vmatpush.msra.mxu0 %v368
    %453 = vmatpush.msra.mxu0 %v366
    %454 = vmatpush.msra.mxu0 %v364
    %455 = vmatmul.f32.gmra.mxu0 %v435
    %v456 = vpop.f32.mrf.mxu0
    %v457 = vadd.f32 0.0, %v456
    %458 = vdwg.mxu0
    %459 = vmatpush.msra.mxu0 %v426
    %460 = vmatpush.msra.mxu0 %v424
    %461 = vmatpush.msra.mxu0 %v422
    %462 = vmatpush.msra.mxu0 %v420
    %463 = vmatpush.msra.mxu0 %v418
    %464 = vmatpush.msra.mxu0 %v416
    %465 = vmatpush.msra.mxu0 %v414
    %466 = vmatpush.msra.mxu0 %v412
    %467 = vmatpush.msra.mxu0 %v410
    %468 = vmatpush.msra.mxu0 %v408
    %469 = vmatpush.msra.mxu0 %v406
    %470 = vmatpush.msra.mxu0 %v404
    %471 = vmatpush.msra.mxu0 %v402
    %472 = vmatpush.msra.mxu0 %v400
    %473 = vmatpush.msra.mxu0 %v398
    %474 = vmatpush.msra.mxu0 %v396
    %475 = vmatmul.f32.gmra.mxu0 %v436
    %v476 = vpop.f32.mrf.mxu0
    %v477 = vadd.f32 %v457, %v476
    %478 = vdwg.mxu0
    %479 = vmatpush.msra.mxu0 %v395
    %480 = vmatpush.msra.mxu0 %v393
    %481 = vmatpush.msra.mxu0 %v391
    %482 = vmatpush.msra.mxu0 %v389
    %483 = vmatpush.msra.mxu0 %v387
    %484 = vmatpush.msra.mxu0 %v385
    %485 = vmatpush.msra.mxu0 %v383
    %486 = vmatpush.msra.mxu0 %v381
    %487 = vmatpush.msra.mxu0 %v379
    %488 = vmatpush.msra.mxu0 %v377
    %489 = vmatpush.msra.mxu0 %v375
    %490 = vmatpush.msra.mxu0 %v373
    %491 = vmatpush.msra.mxu0 %v371
    %492 = vmatpush.msra.mxu0 %v369
    %493 = vmatpush.msra.mxu0 %v367
    %494 = vmatpush.msra.mxu0 %v365
    %495 = vmatmul.f32.gmra.mxu0 %v435
    %v496 = vpop.f32.mrf.mxu0
    %v497 = vadd.f32 0.0, %v496
    %498 = vdwg.mxu0
    %499 = vmatpush.msra.mxu0 %v427
    %500 = vmatpush.msra.mxu0 %v425
    %501 = vmatpush.msra.mxu0 %v423
    %502 = vmatpush.msra.mxu0 %v421
    %503 = vmatpush.msra.mxu0 %v419
    %504 = vmatpush.msra.mxu0 %v417
    %505 = vmatpush.msra.mxu0 %v415
    %506 = vmatpush.msra.mxu0 %v413
    %507 = vmatpush.msra.mxu0 %v411
    %508 = vmatpush.msra.mxu0 %v409
    %509 = vmatpush.msra.mxu0 %v407
    %510 = vmatpush.msra.mxu0 %v405
    %511 = vmatpush.msra.mxu0 %v403
    %512 = vmatpush.msra.mxu0 %v401
    %513 = vmatpush.msra.mxu0 %v399
    %514 = vmatpush.msra.mxu0 %v397
    %515 = vmatmul.f32.gmra.mxu0 %v436
    %v516 = vpop.f32.mrf.mxu0
    %v517 = vadd.f32 %v497, %v516
    %518 = vdwg.mxu0
    %519 = vst [vmem:[#allocation12] sm:$0xff] %v432
    %v522 = vrot.slane %v517, 4
    %vm523 = vcmask 1043456
    %v524 = vsel %vm523, %v477, %v522
    %526 = vst [vmem:[#allocation10] sm:$0xff] %v524
    %s527 = scalar_lea.smem [#allocation13], 0
    %528 = sst [smem:[%s527]] %s58
    %s529 = scalar_lea.smem [#allocation14], 0
    %530 = sst [smem:[%s529]] %s59
    // Predicated region
    $region29: #{tpu_custom_call.1} parent=1 // pred_check
      _
    $region30: #{tpu_custom_call.1} parent=1 // pred_check_branch
      %532 = sbr.rel (0) target = $region32
    $region31: #{tpu_custom_call.1} parent=1 // pred_region
      %534 = vsyncadd [#allocation5], 0
      %s536 = sshll.u32 [#allocation9], 4
      %s537 = int_to_ptr.vmem [resolvable:$true] %s536
      %s538 = sshll.u32 %s3, 4
      %s539 = int_to_ptr.hbm [resolvable:$true] %s538
      %541 = dma.vmem_to_hbm [thread:$0]  %s537, 128, %s539, [#allocation5]
    $region32: #{tpu_custom_call.1} parent=1 // pred_fallthru
      _
    // Predicated region
    $region33: #{tpu_custom_call.1} parent=1 // pred_check
      _
    $region34: #{tpu_custom_call.1} parent=1 // pred_check_branch
      %543 = sbr.rel (0) target = $region36
    $region35: #{tpu_custom_call.1} parent=1 // pred_region
      %545 = vsyncadd [#allocation11], 0
      %s547 = sshll.u32 [#allocation10], 4
      %s548 = int_to_ptr.vmem [resolvable:$true] %s547
      %s549 = sshll.u32 %s4, 4
      %s550 = int_to_ptr.hbm [resolvable:$true] %s549
      %552 = dma.vmem_to_hbm [thread:$0]  %s548, 128, %s550, [#allocation11]
    $region36: #{tpu_custom_call.1} parent=1 // pred_fallthru
      _
    // Predicated region
    $region37: #{tpu_custom_call.1} parent=1 // pred_check
      _
    $region38: #{tpu_custom_call.1} parent=1 // pred_check_branch
      %554 = sbr.rel (0) target = $region40
    $region39: #{tpu_custom_call.1} parent=1 // pred_region
      %556 = vsyncadd [#allocation11], 0
      %s558 = sshll.u32 [#allocation12], 4
      %s559 = int_to_ptr.vmem [resolvable:$true] %s558
      %s560 = sshll.u32 %s5, 4
      %s561 = int_to_ptr.hbm [resolvable:$true] %s560
      %563 = dma.vmem_to_hbm [thread:$0]  %s559, 128, %s561, [#allocation11]
    $region40: #{tpu_custom_call.1} parent=1 // pred_fallthru
      _
    // Predicated region
    $region41: #{tpu_custom_call.1} parent=1 // pred_check
      _
    $region42: #{tpu_custom_call.1} parent=1 // pred_check_branch
      %565 = sbr.rel (0) target = $region44
    $region43: #{tpu_custom_call.1} parent=1 // pred_region
      %567 = vsyncadd [#allocation6], 0
      %s569 = sshll.u32 %s6, 4
      %s570 = int_to_ptr.hbm [resolvable:$true] %s569
      %572 = dma.smem_to_hbm [#allocation13], 16, %s570, [#allocation6]
    $region44: #{tpu_custom_call.1} parent=1 // pred_fallthru
      _
    // Predicated region
    $region45: #{tpu_custom_call.1} parent=1 // pred_check
      _
    $region46: #{tpu_custom_call.1} parent=1 // pred_check_branch
      %574 = sbr.rel (0) target = $region48
    $region47: #{tpu_custom_call.1} parent=1 // pred_region
      %576 = vsyncadd [#allocation15], 0
      %s578 = sshll.u32 %s7, 4
      %s579 = int_to_ptr.hbm [resolvable:$true] %s578
      %581 = dma.smem_to_hbm [#allocation14], 16, %s579, [#allocation15]
    $region48: #{tpu_custom_call.1} parent=1 // pred_fallthru
      _
    // Predicated region
    $region49: #{tpu_custom_call.1} parent=1 // pred_check
      _
    $region50: #{tpu_custom_call.1} parent=1 // pred_check_branch
      %583 = sbr.rel (0) target = $region52
    $region51: #{tpu_custom_call.1} parent=1 // pred_region
      %585 = dma.done [#allocation5], 128
    $region52: #{tpu_custom_call.1} parent=1 // pred_fallthru
      _
    // Predicated region
    $region53: #{tpu_custom_call.1} parent=1 // pred_check
      _
    $region54: #{tpu_custom_call.1} parent=1 // pred_check_branch
      %587 = sbr.rel (0) target = $region56
    $region55: #{tpu_custom_call.1} parent=1 // pred_region
      %589 = dma.done [#allocation11], 128
    $region56: #{tpu_custom_call.1} parent=1 // pred_fallthru
      _
    // Predicated region
    $region57: #{tpu_custom_call.1} parent=1 // pred_check
      _
    $region58: #{tpu_custom_call.1} parent=1 // pred_check_branch
      %591 = sbr.rel (0) target = $region60
    $region59: #{tpu_custom_call.1} parent=1 // pred_region
      %593 = dma.done [#allocation11], 128
    $region60: #{tpu_custom_call.1} parent=1 // pred_fallthru
      _
    // Predicated region
    $region61: #{tpu_custom_call.1} parent=1 // pred_check
      _
    $region62: #{tpu_custom_call.1} parent=1 // pred_check_branch
      %595 = sbr.rel (0) target = $region64
    $region63: #{tpu_custom_call.1} parent=1 // pred_region
      %597 = dma.done [#allocation6], 16
    $region64: #{tpu_custom_call.1} parent=1 // pred_fallthru
      _
    // Predicated region
    $region65: #{tpu_custom_call.1} parent=1 // pred_check
      _
    $region66: #{tpu_custom_call.1} parent=1 // pred_check_branch
      %599 = sbr.rel (0) target = $region68
    $region67: #{tpu_custom_call.1} parent=1 // pred_region
      %601 = dma.done [#allocation15], 16
    $region68: #{tpu_custom_call.1} parent=1 // pred_fallthru
      _
    %602 = sfence
    %603 = vsyncpa [#allocation4], 1
    %604 = vsyncpa [#allocation8], 1
    %605 = vsyncpa [#allocation5], 1
    %606 = vsyncpa [#allocation11], 1
    %607 = vsyncpa [#allocation6], 1
    %608 = vsyncpa [#allocation15], 1

</llo_original>
